<compile_context>
chip_gen: v5e
topology: v5e:2x2
jax: 0.10.0
libtpu: 0.0.40
codegen_flags: <defaults>
</compile_context>

<pallas_src>
import functools

import jax
import jax.numpy as jnp
from jax.experimental import pallas as pl
from jax.experimental.pallas import tpu as pltpu


# ----------------------------------------------------------------------------
# Kernels
# ----------------------------------------------------------------------------
def _identity_kernel(x_ref, o_ref):
    # Whole-tile load -> store; a subclass's real forward compute goes here.
    # NOTE(v5e): keep this body free of filler VPU work — v5e has 1 vst slot and
    # ~820 GB/s HBM, so extra elementwise ops in a copy loop are not free there.
    o_ref[...] = x_ref[...]


def _hbm_copy_kernel(x_hbm_ref, o_hbm_ref, sem):
    # True pass-through: one HBM->HBM DMA, no VMEM staging, no vreg traffic.
    cp = pltpu.make_async_copy(x_hbm_ref, o_hbm_ref, sem)
    cp.start()
    cp.wait()


# ----------------------------------------------------------------------------
# Tiling helpers
# ----------------------------------------------------------------------------
_MIN_PIPELINE_BYTES = 2 * 1024 * 1024   # below this a single block is fine
_MIN_GRID_STEPS = 4                     # >=4 steps: pipeline overlap + 2 TCs on v7x


def _sublane_min(dtype) -> int:
    """Minimum second-to-last block dim for this dtype (sub-32-bit packs sublanes)."""
    itemsize = jnp.dtype(dtype).itemsize
    if itemsize >= 4:
        return 8
    if itemsize == 2:
        return 16
    return 32


def _vmem_budget():
    """Generation-aware (per-buffer bytes, scoped vmem_limit_bytes).

    v5e/v6e (128 MiB VMEM): limit 48 MiB (v5e's default scoped limit is only
    16 MiB, so the explicit override matters most there).
    v7x (64 MiB VMEM): limit 40 MiB, leaving ~24 MiB headroom for Mosaic
    internal scratch.
    """
    try:
        cap = int(pltpu.get_tpu_info().vmem_capacity_bytes)
    except Exception:  # unknown / interpret mode: assume smallest (v7x per-TC)
        cap = 64 * 1024 * 1024
    vmem_limit = min(48 * 1024 * 1024, (cap * 5) // 8)
    # in + out, double-buffered = 4 live pipeline buffers; keep ~4 MiB slack.
    per_buffer = max(1 * 1024 * 1024, (vmem_limit - 4 * 1024 * 1024) // 4)
    return per_buffer, vmem_limit


def _as_lane_dense_2d(x: jax.Array) -> jax.Array:
    """Flatten to a lane-dense [rows, cols] slab; cols is a large multiple of 128.

    Lane-dense last dims avoid masked vst.msk partial stores (biggest measured
    single lever).  Pure wrapper-side reshape, no extra compute.
    """
    size = x.size
    for w in (2048, 1024, 512, 256, 128):
        if size % w == 0:
            return x.reshape(size // w, w)
    # Fallback (size not a multiple of 128): keep a 2-D view; stores may mask.
    if x.ndim >= 2:
        return x.reshape(-1, x.shape[-1])
    return x.reshape(1, size)


def _choose_tiling(rows: int, cols: int, itemsize: int, sub: int,
                   per_buffer_bytes: int):
    """Pick (block_rows, block_cols) honoring the per-buffer VMEM budget.

    block_cols is either the full width or a multiple of 128; block_rows is
    either the full height or a multiple of the dtype sublane minimum.
    """
    # Column tiling only when one sublane-min full-width row block would exceed
    # the budget (previously this case silently overshot the budget).
    if sub * cols * itemsize > per_buffer_bytes and cols > 128:
        block_cols = max(128, min(cols,
                                  (per_buffer_bytes // (sub * itemsize)) // 128 * 128))
    else:
        block_cols = cols

    row_bytes = max(1, block_cols * itemsize)
    cap = max(sub, (per_buffer_bytes // row_bytes) // sub * sub)

    total_bytes = rows * cols * itemsize
    if (block_cols == cols and total_bytes >= _MIN_PIPELINE_BYTES
            and rows >= _MIN_GRID_STEPS * sub):
        # Guarantee >= _MIN_GRID_STEPS row steps: lets Pallas overlap writeback
        # of block i-1 with fetch of block i+1, and gives both v7x TensorCores
        # work on the "parallel" axis.  Per-step overhead (~0.35 us) stays
        # negligible at these block sizes.
        target = pl.cdiv(pl.cdiv(rows, _MIN_GRID_STEPS), sub) * sub
        cap = min(cap, max(sub, target))

    if rows <= cap:
        block_rows = rows                      # full-height block (small arrays)
    else:
        block_rows = max(sub, (cap // sub) * sub)
    return block_rows, block_cols


# ----------------------------------------------------------------------------
# Wrappers
# ----------------------------------------------------------------------------
def pallas_identity(x: jax.Array, *, alias_input: bool = False) -> jax.Array:
    """Tiled, lane-dense elementwise pass-through on TPU via Pallas.

    Flattens to a lane-dense 2-D slab, tiles rows (and, for extremely wide
    slabs, columns) inside a generation-aware VMEM budget, and restores the
    caller's shape.
    """
    orig_shape = x.shape
    x2d = _as_lane_dense_2d(x)
    rows, cols = x2d.shape
    itemsize = jnp.dtype(x.dtype).itemsize
    sub = _sublane_min(x.dtype)
    per_buffer, vmem_limit = _vmem_budget()

    block_rows, block_cols = _choose_tiling(rows, cols, itemsize, sub, per_buffer)
    grid_rows = pl.cdiv(rows, block_rows)
    grid_cols = pl.cdiv(cols, block_cols)

    # In/out index maps are IDENTICAL and blocks are disjoint, which is what
    # makes input_output_aliases={0: 0} safe: the pipelined writeback of block
    # i-1 never overlaps the prefetch of block i+1 in the aliased HBM buffer.
    # Subclasses that change either index_map must drop the aliasing path.
    if grid_cols == 1:
        grid = (grid_rows,)
        in_spec = pl.BlockSpec((block_rows, block_cols), lambda i: (i, 0))
        out_spec = pl.BlockSpec((block_rows, block_cols), lambda i: (i, 0))
        dims = ("parallel",)
    else:
        grid = (grid_rows, grid_cols)
        in_spec = pl.BlockSpec((block_rows, block_cols), lambda i, j: (i, j))
        out_spec = pl.BlockSpec((block_rows, block_cols), lambda i, j: (i, j))
        dims = ("parallel", "parallel")

    y2d = pl.pallas_call(
        _identity_kernel,
        out_shape=jax.ShapeDtypeStruct((rows, cols), x.dtype),
        grid=grid,
        in_specs=[in_spec],
        out_specs=out_spec,
        input_output_aliases=({0: 0} if alias_input else {}),
        cost_estimate=pl.CostEstimate(
            flops=0, transcendentals=0,
            bytes_accessed=2 * rows * cols * itemsize),
        compiler_params=pltpu.CompilerParams(
            # Row/col axes are independent elementwise tiles -> megacore-shardable.
            dimension_semantics=dims,
            # Generation-aware scoped VMEM limit (see _vmem_budget); the
            # explicit override matters most on v5e (16 MiB default).
            vmem_limit_bytes=vmem_limit,
        ),
    )(x2d)
    return y2d.reshape(orig_shape)


def pallas_hbm_copy(x: jax.Array) -> jax.Array:
    """True pass-through: single HBM->HBM DMA, no VMEM round trip.

    For a genuine identity this is strictly cheaper than the tiled copy on every
    generation (the tiled path exists only as a template for subclass compute).
    """
    itemsize = jnp.dtype(x.dtype).itemsize
    return pl.pallas_call(
        _hbm_copy_kernel,
        out_shape=jax.ShapeDtypeStruct(x.shape, x.dtype),
        in_specs=[pl.BlockSpec(memory_space=pl.ANY)],
        out_specs=pl.BlockSpec(memory_space=pl.ANY),
        scratch_shapes=[pltpu.SemaphoreType.DMA(())],
        cost_estimate=pl.CostEstimate(
            flops=0, transcendentals=0, bytes_accessed=2 * x.size * itemsize),
    )(x)


# Donating / aliasing path: for a *true* identity this avoids a second HBM
# allocation (output aliases the input buffer).
@functools.partial(jax.jit, donate_argnums=(0,))
def pallas_identity_inplace(x: jax.Array) -> jax.Array:
    return pallas_identity(x, alias_input=True)


# ----------------------------------------------------------------------------
# BaseModel: faithful JAX-side port of the PyTorch module's semantics
# ----------------------------------------------------------------------------
class BaseModel:
    def __init__(self, **kwargs) -> None:
        for key, value in kwargs.items():
            setattr(self, key, value)
        assert hasattr(self, "output_arrays"), (
            "Model object must have list attribute `output_arrays` indicating "
            "what arrays are output by the model's forward pass, in order."
        )

    def add_log(self, writer, iter):
        pass

    def forward(self):
        # Matches PyTorch BaseModel.forward exactly: no inputs, returns None.
        return

    def __call__(self):
        return self.forward()


if __name__ == "__main__":
    # Deterministic construction (no checkpoint / file IO).
    model = BaseModel(output_arrays=["pred"])

    # Exercise the (empty) forward pass — must return None, as in PyTorch.
    assert model() is None

    key = jax.random.PRNGKey(0)
    k0, k1, k2, k3, k4 = jax.random.split(key, 5)

    # 1) 4-D input at module-plausible small shape; wrapper flattens lane-dense.
    x4d = jax.random.normal(k0, (2, 4, 16, 16), dtype=jnp.float32)
    y4d = pallas_identity(x4d)
    jax.block_until_ready(y4d)
    assert y4d.shape == x4d.shape and y4d.dtype == x4d.dtype
    assert bool(jnp.array_equal(y4d, x4d))

    # 2) 2 MiB f32 input: exercises the multi-step (>=4) pipelined row grid.
    xm = jax.random.normal(k1, (1024, 512), dtype=jnp.float32)
    ym = pallas_identity(xm)
    jax.block_until_ready(ym)
    assert bool(jnp.array_equal(ym, xm))

    # 3) bf16 input (sublane minimum 16), odd caller shape -> lane-dense slab.
    xb = jax.random.normal(k2, (96, 384), dtype=jnp.float32).astype(jnp.bfloat16)
    yb = pallas_identity(xb)
    jax.block_until_ready(yb)
    assert yb.shape == xb.shape and yb.dtype == xb.dtype
    assert bool(jnp.array_equal(yb, xb))

    # 4) True pass-through: single HBM->HBM DMA, no VMEM staging.
    xh = jax.random.normal(k3, (64, 512), dtype=jnp.float32)
    yh = pallas_hbm_copy(xh)
    jax.block_until_ready(yh)
    assert bool(jnp.array_equal(yh, xh))

    # 5) Aliased (donated) path — output shares the input's HBM buffer.
    x2 = jax.random.normal(k4, (64, 512), dtype=jnp.float32)
    x2_host = jax.device_get(x2)  # reference copy taken before donation
    y2 = pallas_identity_inplace(x2)
    jax.block_until_ready(y2)
    assert y2.shape == (64, 512) and y2.dtype == jnp.float32
    assert bool(jnp.array_equal(y2, jnp.asarray(x2_host)))

    print("KERNEL_OK")
</pallas_src>

<mosaic_0001>
module attributes {stable_mosaic.version = 11 : i64} {
  func.func @_identity_kernel(%arg0: i32, %arg1: memref<1x2048xf32, #tpu.memory_space<vmem>>, %arg2: memref<1x2048xf32, #tpu.memory_space<vmem>>) attributes {dimension_semantics = [#tpu.dimension_semantics<parallel>], iteration_bounds = array<i64: 1>, scalar_prefetch = 0 : i64, scratch_operands = 0 : i64, tpu.core_type = #tpu.core_type<tc>, window_params = [{transform_indices = @transform_0, window_bounds = array<i64: 1, 2048>}, {transform_indices = @transform_1, window_bounds = array<i64: 1, 2048>}]} {
    %c0 = arith.constant 0 : index
    %c0_0 = arith.constant 0 : index
    %0 = vector.load %arg1[%c0, %c0_0] : memref<1x2048xf32, #tpu.memory_space<vmem>>, vector<1x2048xf32>
    %c0_1 = arith.constant 0 : index
    %c0_2 = arith.constant 0 : index
    %1 = vector.load %arg2[%c0_1, %c0_2] : memref<1x2048xf32, #tpu.memory_space<vmem>>, vector<1x2048xf32>
    tpu.vector_store %arg2[%c0_1, %c0_2], %0 {strides = array<i32>} : memref<1x2048xf32, #tpu.memory_space<vmem>>, vector<1x2048xf32>,
    return
  }
  func.func @transform_0(%arg0: i32) -> (i32, i32) {
    %c0_i32 = arith.constant 0 : i32
    %c0_i32_0 = arith.constant 0 : i32
    return %arg0, %c0_i32 : i32, i32
  }
  func.func @transform_1(%arg0: i32) -> (i32, i32) {
    %c0_i32 = arith.constant 0 : i32
    %c0_i32_0 = arith.constant 0 : i32
    return %arg0, %c0_i32 : i32, i32
  }
}

</mosaic_0001>

<llo_original>
// kernel: tpu_custom_call.1
$region0: #{tpu_custom_call.1}
  #allocation0 [shape = 'u32[]', space=smem, size = 0x4, offset = 0x4, fixed_abs, tag = 'smem constant byte address 0x4 - core index']
  #allocation1 [shape = 'u32[72,128]{1,0:T(1,128)}', space=vmem, size = 0x9000, scoped, tag = 'internal scratch']
  %s0 = inlined_call_operand.hbm [shape: f32[1,2048], index: 0, kind: input, shape index: {}]
  %s1 = inlined_call_operand.hbm [shape: f32[1,2048], index: 1, kind: output, shape index: {}]
  %s2 = sld [smem:[#allocation0]]
  $region18: #{tpu_custom_call.1} parent=0
    _
  %s4 = ssub.s32 1, %s2
  %s5 = scalar_select 0, %s4, %s2
  $region1: #{tpu_custom_call.1} parent=0
    #allocation2 [shape = 'u8[8192]{0}', space=vmem, size = 0x2000, scoped, tag = 'input window, operand 0, single buffered']
    #allocation3 [shape = 's32[1]{0}', space=sflag, size = 0x4, scoped, tag = 'scoped memory for tpu_custom_call.1']
    #allocation4 [shape = 's32[1]{0}', space=sflag, size = 0x4, scoped, tag = 'scoped memory for tpu_custom_call.1']
    #allocation5 [shape = 'u8[8192]{0}', space=vmem, size = 0x2000, scoped, tag = 'output window, operand 0, single buffered']
    %6 = vsyncpa [#allocation3], 0
    %7 = vsyncpa [#allocation4], 0
    // Predicated region
    $region2: #{tpu_custom_call.1} parent=1 // pred_check
      _
    $region3: #{tpu_custom_call.1} parent=1 // pred_check_branch
      %9 = sbr.rel (0) target = $region5
    $region4: #{tpu_custom_call.1} parent=1 // pred_region
      %11 = vsyncadd [#allocation3], 0
      %s13 = sshll.u32 %s0, 4
      %s14 = int_to_ptr.hbm [resolvable:$true] %s13
      %s15 = sshll.u32 [#allocation2], 4
      %s16 = int_to_ptr.vmem [resolvable:$true] %s15
      %18 = dma.hbm_to_vmem [thread:$0]  %s14, 256, %s16, [#allocation3]
    $region5: #{tpu_custom_call.1} parent=1 // pred_fallthru
      _
    // Predicated region
    $region6: #{tpu_custom_call.1} parent=1 // pred_check
      _
    $region7: #{tpu_custom_call.1} parent=1 // pred_check_branch
      %20 = sbr.rel (0) target = $region9
    $region8: #{tpu_custom_call.1} parent=1 // pred_region
      %22 = dma.done [#allocation3], 256
    $region9: #{tpu_custom_call.1} parent=1 // pred_fallthru
      _
    %v23 = vld [vmem:[#allocation2] sm:$0xff]
    %v24 = vld [vmem:[#allocation2 + $0x8] sm:$0xff]
    %25 = vst [vmem:[#allocation5] sm:$0xff] %v23
    %26 = vst [vmem:[#allocation5 + $0x8] sm:$0xff] %v24
    // Predicated region
    $region10: #{tpu_custom_call.1} parent=1 // pred_check
      _
    $region11: #{tpu_custom_call.1} parent=1 // pred_check_branch
      %28 = sbr.rel (0) target = $region13
    $region12: #{tpu_custom_call.1} parent=1 // pred_region
      %30 = vsyncadd [#allocation4], 0
      %s32 = sshll.u32 [#allocation5], 4
      %s33 = int_to_ptr.vmem [resolvable:$true] %s32
      %s34 = sshll.u32 %s1, 4
      %s35 = int_to_ptr.hbm [resolvable:$true] %s34
      %37 = dma.vmem_to_hbm [thread:$0]  %s33, 256, %s35, [#allocation4]
    $region13: #{tpu_custom_call.1} parent=1 // pred_fallthru
      _
    // Predicated region
    $region14: #{tpu_custom_call.1} parent=1 // pred_check
      _
    $region15: #{tpu_custom_call.1} parent=1 // pred_check_branch
      %39 = sbr.rel (0) target = $region17
    $region16: #{tpu_custom_call.1} parent=1 // pred_region
      %41 = dma.done [#allocation4], 256
    $region17: #{tpu_custom_call.1} parent=1 // pred_fallthru
      _
    %42 = vsyncpa [#allocation3], 1
    %43 = vsyncpa [#allocation4], 1

</llo_original>
